<compile_context>
chip_gen: v7x
topology: tpu7x:2x2x1
jax: 0.10.0
libtpu: 0.0.40
codegen_flags: <defaults>
</compile_context>

<pallas_src>
import numpy as np
import jax
import jax.numpy as jnp
from jax.experimental import pallas as pl
from jax.experimental.pallas import tpu as pltpu

LANE = 128            # vreg lane width
MAX_TILE_ROWS = 2048  # 2048*128*4B = 1 MiB per f32 input tile; 3 inputs x 2 bufs = 6 MiB
NUM_SUMS = 4          # [sum(labels), sum(loss_pos_pix), sum(loss_neg_pix), sum(void>=0.5)]


def _partial_sum(x):
    """(T, LANE) f32 -> (8, LANE) partial sum using only VPU adds (no cross-lane XLU)."""
    return jnp.sum(x.reshape(-1, 8, LANE), axis=0)


def _make_kernel(has_void):
    """Kernel computing the global sums the loss needs, specialized on void usage."""

    def kernel(*refs):
        if has_void:
            p_ref, l_ref, v_ref, out_ref = refs
        else:
            p_ref, l_ref, out_ref = refs

        @pl.when(pl.program_id(1) == 0)
        def _():
            out_ref[...] = jnp.zeros_like(out_ref)

        p = p_ref[...].astype(jnp.float32)
        l = l_ref[...].astype(jnp.float32)

        gz = (p >= 0.0).astype(jnp.float32)                      # torch.ge(preds, 0)
        # numerically-stable BCE-with-logits term (same formula as the PyTorch code);
        # the exp argument is always <= 0 so no overflow.
        loss_val = p * (l - gz) - jnp.log(1.0 + jnp.exp(p - 2.0 * p * gz))
        loss_pos_pix = -(l * loss_val)
        loss_neg_pix = -((1.0 - l) * loss_val)

        if has_void:
            v = v_ref[...].astype(jnp.float32)
            w_void = (v <= 0.5).astype(jnp.float32)
            loss_pos_pix = loss_pos_pix * w_void
            loss_neg_pix = loss_neg_pix * w_void
            out_ref[3] += _partial_sum((v >= 0.5).astype(jnp.float32))

        out_ref[0] += _partial_sum(l)
        out_ref[1] += _partial_sum(loss_pos_pix)
        out_ref[2] += _partial_sum(loss_neg_pix)

    return kernel


def _round_up(x, m):
    return ((x + m - 1) // m) * m


def _prep(x, pad_value, rows_padded):
    """Flatten (free reshape) and pad only the tail remainder; keep native dtype."""
    flat = x.reshape(-1)
    pad = rows_padded * LANE - flat.shape[0]
    if pad > 0:
        flat = jnp.pad(flat, (0, pad), constant_values=pad_value)
    return flat.reshape(rows_padded, LANE)


def balanced_cross_entropy_loss(preds, labels, void_pixels=None,
                                size_average=True, batch_average=True,
                                pos_weight=None):
    assert preds.shape == labels.shape
    total = int(np.prod(preds.shape))

    rows = pl.cdiv(total, LANE)
    tile_rows = min(MAX_TILE_ROWS, _round_up(rows, 8))
    steps = pl.cdiv(rows, tile_rows)
    num_shards = 2 if steps >= 2 else 1       # v7x: 2 TensorCores; harmless on v5e/v6e
    steps_per_shard = pl.cdiv(steps, num_shards)
    rows_padded = num_shards * steps_per_shard * tile_rows

    # void mask is only applied when pos_weight is falsy (matches the PyTorch module)
    use_void = (void_pixels is not None) and (not pos_weight)

    # Keep native dtypes in HBM (cast to f32 inside the kernel): HBM bytes are the roofline.
    # Pad values: preds=-1e4, labels=0, void=0 -> exactly zero contribution to every sum.
    p2 = _prep(preds, -1e4, rows_padded)
    l2 = _prep(labels, 0, rows_padded)
    inputs = [p2, l2]
    if use_void:
        inputs.append(_prep(void_pixels, 0, rows_padded))

    tile_spec = pl.BlockSpec((tile_rows, LANE),
                             lambda s, i: (s * steps_per_shard + i, 0))
    out_spec = pl.BlockSpec((None, NUM_SUMS, 8, LANE), lambda s, i: (s, 0, 0, 0))

    partials = pl.pallas_call(
        _make_kernel(use_void),
        out_shape=jax.ShapeDtypeStruct((num_shards, NUM_SUMS, 8, LANE), jnp.float32),
        grid=(num_shards, steps_per_shard),
        in_specs=[tile_spec] * len(inputs),
        out_specs=out_spec,
        compiler_params=pltpu.CompilerParams(
            dimension_semantics=("parallel", "arbitrary")),
    )(*inputs)

    # single cheap cross-lane reduction of the (num_shards, 4, 8, 128) partials
    sums = jnp.sum(partials, axis=(0, 2, 3))      # (NUM_SUMS,)
    num_labels_pos = sums[0]
    loss_pos = sums[1]
    loss_neg = sums[2]

    if pos_weight is None:
        num_labels_neg = jnp.float32(total) - num_labels_pos
        num_total = jnp.float32(total)
        if use_void:
            num_total = num_total - sums[3]
        w = num_labels_neg / num_total
    else:
        w = jnp.float32(pos_weight)

    final_loss = w * loss_pos + (1.0 - w) * loss_neg
    if size_average:
        final_loss = final_loss / float(total)
    elif batch_average:
        final_loss = final_loss / float(preds.shape[0])
    return final_loss


def _reference_loss(preds, labels, void_pixels=None):
    # plain-JAX transcription of the PyTorch forward (default args) for validation
    preds = preds.astype(jnp.float32)
    labels = labels.astype(jnp.float32)
    num_pos = jnp.sum(labels)
    num_neg = jnp.sum(1.0 - labels)
    num_total = num_pos + num_neg
    w = num_neg / num_total
    gz = (preds >= 0).astype(jnp.float32)
    loss_val = preds * (labels - gz) - jnp.log(1.0 + jnp.exp(preds - 2.0 * preds * gz))
    loss_pos_pix = -labels * loss_val
    loss_neg_pix = -(1.0 - labels) * loss_val
    if void_pixels is not None:
        vf = void_pixels.astype(jnp.float32)
        w_void = (vf <= 0.5).astype(jnp.float32)
        loss_pos_pix = w_void * loss_pos_pix
        loss_neg_pix = w_void * loss_neg_pix
        num_total = num_total - jnp.sum((vf >= 0.5).astype(jnp.float32))
        w = num_neg / num_total
    loss_pos = jnp.sum(loss_pos_pix)
    loss_neg = jnp.sum(loss_neg_pix)
    return (w * loss_pos + (1.0 - w) * loss_neg) / float(np.prod(preds.shape))


if __name__ == "__main__":
    key = jax.random.PRNGKey(0)
    k1, k2, k3, k4, k5 = jax.random.split(key, 5)

    # case 1: default path (no void), lane-aligned shape
    B, C, H, W = 2, 4, 16, 16
    preds = jax.random.normal(k1, (B, C, H, W), dtype=jnp.float32)             # logits
    labels = jax.random.bernoulli(k2, 0.3, (B, C, H, W)).astype(jnp.float32)   # binary GT

    loss = jax.block_until_ready(balanced_cross_entropy_loss(preds, labels))
    ref = jax.block_until_ready(_reference_loss(preds, labels))
    assert np.allclose(np.asarray(loss), np.asarray(ref), rtol=1e-5, atol=1e-6), (loss, ref)

    # case 2: void map + non-lane-aligned shape (exercises tail padding + void kernel)
    B2, C2, H2, W2 = 2, 4, 16, 15
    preds2 = jax.random.normal(k3, (B2, C2, H2, W2), dtype=jnp.float32)
    labels2 = jax.random.bernoulli(k4, 0.3, (B2, C2, H2, W2)).astype(jnp.float32)
    void2 = jax.random.bernoulli(k5, 0.1, (B2, C2, H2, W2)).astype(jnp.float32)

    loss2 = jax.block_until_ready(
        balanced_cross_entropy_loss(preds2, labels2, void_pixels=void2))
    ref2 = jax.block_until_ready(_reference_loss(preds2, labels2, void_pixels=void2))
    assert np.allclose(np.asarray(loss2), np.asarray(ref2), rtol=1e-5, atol=1e-6), (loss2, ref2)

    print("KERNEL_OK")
</pallas_src>

<mosaic_0001>
module attributes {stable_mosaic.version = 11 : i64} {
  func.func @kernel(%arg0: i32, %arg1: i32, %arg2: memref<16x128xf32, #tpu.memory_space<vmem>>, %arg3: memref<16x128xf32, #tpu.memory_space<vmem>>, %arg4: memref<1x4x8x128xf32, #tpu.memory_space<vmem>>) attributes {dimension_semantics = [#tpu.dimension_semantics<parallel>, #tpu.dimension_semantics<arbitrary>], iteration_bounds = array<i64: 1, 1>, scalar_prefetch = 0 : i64, scratch_operands = 0 : i64, tpu.core_type = #tpu.core_type<tc>, window_params = [{transform_indices = @transform_0, window_bounds = array<i64: 16, 128>}, {transform_indices = @transform_1, window_bounds = array<i64: 16, 128>}, {transform_indices = @transform_2, window_bounds = array<i64: 1, 4, 8, 128>}]} {
    %c0_i32 = arith.constant 0 : i32
    %0 = arith.cmpi eq, %arg1, %c0_i32 : i32
    %1 = arith.extui %0 : i1 to i32
    %c0_i32_0 = arith.constant 0 : i32
    %2 = arith.cmpi ne, %1, %c0_i32_0 : i32
    scf.if %2 {
      %cst_34 = arith.constant 0.000000e+00 : f32
      %52 = vector.broadcast %cst_34 : f32 to vector<4x8x128xf32>
      %c0_35 = arith.constant 0 : index
      %c0_36 = arith.constant 0 : index
      %c0_37 = arith.constant 0 : index
      %c0_38 = arith.constant 0 : index
      %53 = vector.load %arg4[%c0_35, %c0_36, %c0_37, %c0_38] : memref<1x4x8x128xf32, #tpu.memory_space<vmem>>, vector<1x4x8x128xf32>
      %54 = vector.shape_cast %53 : vector<1x4x8x128xf32> to vector<4x8x128xf32>
      %55 = vector.shape_cast %52 : vector<4x8x128xf32> to vector<1x4x8x128xf32>
      tpu.vector_store %arg4[%c0_35, %c0_36, %c0_37, %c0_38], %55 {strides = array<i32>} : memref<1x4x8x128xf32, #tpu.memory_space<vmem>>, vector<1x4x8x128xf32>,
    } else {
    }
    %c0 = arith.constant 0 : index
    %c0_1 = arith.constant 0 : index
    %3 = vector.load %arg2[%c0, %c0_1] : memref<16x128xf32, #tpu.memory_space<vmem>>, vector<16x128xf32>
    %c0_2 = arith.constant 0 : index
    %c0_3 = arith.constant 0 : index
    %4 = vector.load %arg3[%c0_2, %c0_3] : memref<16x128xf32, #tpu.memory_space<vmem>>, vector<16x128xf32>
    %cst = arith.constant 0.000000e+00 : f32
    %5 = vector.broadcast %cst : f32 to vector<16x128xf32>
    %6 = arith.cmpf oge, %3, %5 : vector<16x128xf32>
    %7 = arith.extui %6 : vector<16x128xi1> to vector<16x128xi32>
    %8 = arith.sitofp %7 : vector<16x128xi32> to vector<16x128xf32>
    %9 = arith.subf %4, %8 : vector<16x128xf32>
    %10 = arith.mulf %3, %9 : vector<16x128xf32>
    %cst_4 = arith.constant 2.000000e+00 : f32
    %11 = vector.broadcast %cst_4 : f32 to vector<16x128xf32>
    %12 = arith.mulf %11, %3 : vector<16x128xf32>
    %13 = arith.mulf %12, %8 : vector<16x128xf32>
    %14 = arith.subf %3, %13 : vector<16x128xf32>
    %15 = math.exp %14 : vector<16x128xf32>
    %cst_5 = arith.constant 1.000000e+00 : f32
    %16 = vector.broadcast %cst_5 : f32 to vector<16x128xf32>
    %17 = arith.addf %16, %15 : vector<16x128xf32>
    %18 = math.log %17 : vector<16x128xf32>
    %19 = arith.subf %10, %18 : vector<16x128xf32>
    %20 = arith.mulf %4, %19 : vector<16x128xf32>
    %cst_6 = arith.constant 0.000000e+00 : f32
    %21 = vector.broadcast %cst_6 : f32 to vector<16x128xf32>
    %22 = arith.subf %21, %20 : vector<16x128xf32>
    %cst_7 = arith.constant 1.000000e+00 : f32
    %23 = vector.broadcast %cst_7 : f32 to vector<16x128xf32>
    %24 = arith.subf %23, %4 : vector<16x128xf32>
    %25 = arith.mulf %24, %19 : vector<16x128xf32>
    %cst_8 = arith.constant 0.000000e+00 : f32
    %26 = vector.broadcast %cst_8 : f32 to vector<16x128xf32>
    %27 = arith.subf %26, %25 : vector<16x128xf32>
    %c0_9 = arith.constant 0 : index
    %c0_10 = arith.constant 0 : index
    %c0_11 = arith.constant 0 : index
    %c0_12 = arith.constant 0 : index
    %28 = vector.load %arg4[%c0_9, %c0_10, %c0_11, %c0_12] : memref<1x4x8x128xf32, #tpu.memory_space<vmem>>, vector<1x1x8x128xf32>
    %29 = vector.shape_cast %28 : vector<1x1x8x128xf32> to vector<8x128xf32>
    %30 = vector.shape_cast %4 : vector<16x128xf32> to vector<2x8x128xf32>
    %cst_13 = arith.constant dense<0.000000e+00> : vector<8x128xf32>
    %31 = vector.multi_reduction <add>, %30, %cst_13 [0] : vector<2x8x128xf32> to vector<8x128xf32>
    %32 = arith.addf %29, %31 : vector<8x128xf32>
    %c0_14 = arith.constant 0 : index
    %c0_15 = arith.constant 0 : index
    %c0_16 = arith.constant 0 : index
    %c0_17 = arith.constant 0 : index
    %33 = vector.load %arg4[%c0_14, %c0_15, %c0_16, %c0_17] : memref<1x4x8x128xf32, #tpu.memory_space<vmem>>, vector<1x1x8x128xf32>
    %34 = vector.shape_cast %33 : vector<1x1x8x128xf32> to vector<8x128xf32>
    %35 = vector.shape_cast %32 : vector<8x128xf32> to vector<1x1x8x128xf32>
    tpu.vector_store %arg4[%c0_14, %c0_15, %c0_16, %c0_17], %35 {strides = array<i32>} : memref<1x4x8x128xf32, #tpu.memory_space<vmem>>, vector<1x1x8x128xf32>,
    %c0_18 = arith.constant 0 : index
    %c1 = arith.constant 1 : index
    %c0_19 = arith.constant 0 : index
    %c0_20 = arith.constant 0 : index
    %36 = vector.load %arg4[%c0_18, %c1, %c0_19, %c0_20] : memref<1x4x8x128xf32, #tpu.memory_space<vmem>>, vector<1x1x8x128xf32>
    %37 = vector.shape_cast %36 : vector<1x1x8x128xf32> to vector<8x128xf32>
    %38 = vector.shape_cast %22 : vector<16x128xf32> to vector<2x8x128xf32>
    %cst_21 = arith.constant dense<0.000000e+00> : vector<8x128xf32>
    %39 = vector.multi_reduction <add>, %38, %cst_21 [0] : vector<2x8x128xf32> to vector<8x128xf32>
    %40 = arith.addf %37, %39 : vector<8x128xf32>
    %c0_22 = arith.constant 0 : index
    %c1_23 = arith.constant 1 : index
    %c0_24 = arith.constant 0 : index
    %c0_25 = arith.constant 0 : index
    %41 = vector.load %arg4[%c0_22, %c1_23, %c0_24, %c0_25] : memref<1x4x8x128xf32, #tpu.memory_space<vmem>>, vector<1x1x8x128xf32>
    %42 = vector.shape_cast %41 : vector<1x1x8x128xf32> to vector<8x128xf32>
    %43 = vector.shape_cast %40 : vector<8x128xf32> to vector<1x1x8x128xf32>
    tpu.vector_store %arg4[%c0_22, %c1_23, %c0_24, %c0_25], %43 {strides = array<i32>} : memref<1x4x8x128xf32, #tpu.memory_space<vmem>>, vector<1x1x8x128xf32>,
    %c0_26 = arith.constant 0 : index
    %c2 = arith.constant 2 : index
    %c0_27 = arith.constant 0 : index
    %c0_28 = arith.constant 0 : index
    %44 = vector.load %arg4[%c0_26, %c2, %c0_27, %c0_28] : memref<1x4x8x128xf32, #tpu.memory_space<vmem>>, vector<1x1x8x128xf32>
    %45 = vector.shape_cast %44 : vector<1x1x8x128xf32> to vector<8x128xf32>
    %46 = vector.shape_cast %27 : vector<16x128xf32> to vector<2x8x128xf32>
    %cst_29 = arith.constant dense<0.000000e+00> : vector<8x128xf32>
    %47 = vector.multi_reduction <add>, %46, %cst_29 [0] : vector<2x8x128xf32> to vector<8x128xf32>
    %48 = arith.addf %45, %47 : vector<8x128xf32>
    %c0_30 = arith.constant 0 : index
    %c2_31 = arith.constant 2 : index
    %c0_32 = arith.constant 0 : index
    %c0_33 = arith.constant 0 : index
    %49 = vector.load %arg4[%c0_30, %c2_31, %c0_32, %c0_33] : memref<1x4x8x128xf32, #tpu.memory_space<vmem>>, vector<1x1x8x128xf32>
    %50 = vector.shape_cast %49 : vector<1x1x8x128xf32> to vector<8x128xf32>
    %51 = vector.shape_cast %48 : vector<8x128xf32> to vector<1x1x8x128xf32>
    tpu.vector_store %arg4[%c0_30, %c2_31, %c0_32, %c0_33], %51 {strides = array<i32>} : memref<1x4x8x128xf32, #tpu.memory_space<vmem>>, vector<1x1x8x128xf32>,
    return
  }
  func.func @transform_0(%arg0: i32, %arg1: i32) -> (i32, i32) {
    %c1_i32 = arith.constant 1 : i32
    %0 = arith.muli %arg0, %c1_i32 : i32
    %1 = arith.addi %0, %arg1 : i32
    %c0_i32 = arith.constant 0 : i32
    %c0_i32_0 = arith.constant 0 : i32
    return %1, %c0_i32 : i32, i32
  }
  func.func @transform_1(%arg0: i32, %arg1: i32) -> (i32, i32) {
    %c1_i32 = arith.constant 1 : i32
    %0 = arith.muli %arg0, %c1_i32 : i32
    %1 = arith.addi %0, %arg1 : i32
    %c0_i32 = arith.constant 0 : i32
    %c0_i32_0 = arith.constant 0 : i32
    return %1, %c0_i32 : i32, i32
  }
  func.func @transform_2(%arg0: i32, %arg1: i32) -> (i32, i32, i32, i32) {
    %c0_i32 = arith.constant 0 : i32
    %c0_i32_0 = arith.constant 0 : i32
    %c0_i32_1 = arith.constant 0 : i32
    %c0_i32_2 = arith.constant 0 : i32
    return %arg0, %c0_i32, %c0_i32_0, %c0_i32_1 : i32, i32, i32, i32
  }
}

</mosaic_0001>

<llo_original>
// kernel: tpu_custom_call.1
$region0: #{tpu_custom_call.1}
  #allocation0 [shape = 'u32[]', space=smem, size = 0x4, offset = 0x4, fixed_abs, tag = 'smem constant byte address 0x4 - core index']
  #allocation1 [shape = 'u32[144,128]{1,0:T(1,128)}', space=vmem, size = 0x12000, scoped, tag = 'internal scratch']
  %s0 = inlined_call_operand.hbm [shape: f32[16,128], index: 0, kind: input, shape index: {}]
  %s1 = inlined_call_operand.hbm [shape: f32[16,128], index: 1, kind: input, shape index: {}]
  %s2 = inlined_call_operand.hbm [shape: f32[1,4,8,128], index: 2, kind: output, shape index: {}]
  %s3 = sld [smem:[#allocation0]]
  $region30: #{tpu_custom_call.1} parent=0
    _
  %s5 = ssub.s32 1, %s3
  %s6 = scalar_select 0, %s5, %s3
  $region1: #{tpu_custom_call.1} parent=0
    #allocation2 [shape = 'u8[8192]{0}', space=vmem, size = 0x2000, scoped, tag = 'input window, operand 0, single buffered']
    #allocation3 [shape = 's32[1]{0}', space=sflag, size = 0x4, scoped, tag = 'scoped memory for tpu_custom_call.1']
    #allocation4 [shape = 's32[1]{0}', space=sflag, size = 0x4, scoped, tag = 'scoped memory for tpu_custom_call.1']
    #allocation5 [shape = 'u8[8192]{0}', space=vmem, size = 0x2000, scoped, tag = 'input window, operand 1, single buffered']
    #allocation6 [shape = 's32[1]{0}', space=sflag, size = 0x4, scoped, tag = 'scoped memory for tpu_custom_call.1']
    #allocation7 [shape = 'u8[16384]{0}', space=vmem, size = 0x4000, scoped, tag = 'output window, operand 0, single buffered']
    %7 = vsyncpa [#allocation3], 0
    %8 = vsyncpa [#allocation6], 0
    %9 = vsyncpa [#allocation4], 0
    // Predicated region
    $region2: #{tpu_custom_call.1} parent=1 // pred_check
      _
    $region3: #{tpu_custom_call.1} parent=1 // pred_check_branch
      %11 = sbr.rel (0) target = $region5
    $region4: #{tpu_custom_call.1} parent=1 // pred_region
      %s12 = sadd.s32 0, 0
      %s13 = smul.u32 2, %s12
      %s15 = ssub.s32 256, 256
      %16 = vsyncadd [#allocation3], %s15
      %s17 = smul.addr %s13, 128
      %s18 = scalar_lea.hbm %s0, %s17
      %s19 = sshll.u32 [#allocation2], 4
      %s20 = int_to_ptr.vmem [resolvable:$true] %s19
      %25 = dma.hbm_to_vmem [thread:$0]  %s18, 256, %s20, [#allocation3], 128, 128, 8
    $region5: #{tpu_custom_call.1} parent=1 // pred_fallthru
      _
    // Predicated region
    $region6: #{tpu_custom_call.1} parent=1 // pred_check
      _
    $region7: #{tpu_custom_call.1} parent=1 // pred_check_branch
      %27 = sbr.rel (0) target = $region9
    $region8: #{tpu_custom_call.1} parent=1 // pred_region
      %s28 = sadd.s32 0, 0
      %s29 = smul.u32 2, %s28
      %s31 = ssub.s32 256, 256
      %32 = vsyncadd [#allocation6], %s31
      %s33 = smul.addr %s29, 128
      %s34 = scalar_lea.hbm %s1, %s33
      %s35 = sshll.u32 [#allocation5], 4
      %s36 = int_to_ptr.vmem [resolvable:$true] %s35
      %41 = dma.hbm_to_vmem [thread:$0]  %s34, 256, %s36, [#allocation6], 128, 128, 8
    $region9: #{tpu_custom_call.1} parent=1 // pred_fallthru
      _
    // Predicated region
    $region10: #{tpu_custom_call.1} parent=1 // pred_check
      _
    $region11: #{tpu_custom_call.1} parent=1 // pred_check_branch
      %43 = sbr.rel (0) target = $region13
    $region12: #{tpu_custom_call.1} parent=1 // pred_region
      %44 = dma.done [#allocation3], 256
    $region13: #{tpu_custom_call.1} parent=1 // pred_fallthru
      _
    // Predicated region
    $region14: #{tpu_custom_call.1} parent=1 // pred_check
      _
    $region15: #{tpu_custom_call.1} parent=1 // pred_check_branch
      %46 = sbr.rel (0) target = $region17
    $region16: #{tpu_custom_call.1} parent=1 // pred_region
      %47 = dma.done [#allocation6], 256
    $region17: #{tpu_custom_call.1} parent=1 // pred_fallthru
      _
    %s48 = sadd.s32 0, 0
    %s49 = smul.u32 2, %s48
    %s50 = sadd.s32 0, 0
    %s51 = smul.u32 2, %s50
    %p52 = scmp.eq.s32.totalorder 0, 0
    // Predicated region
    $region18: #{tpu_custom_call.1} parent=1 // pred_check
      %p53 = pneg %p52
    $region19: #{tpu_custom_call.1} parent=1 // pred_check_branch
      %55 = sbr.rel (%p53) target = $region21
    $region20: #{tpu_custom_call.1} parent=1 // pred_region
      %56 = vst [vmem:[#allocation7] sm:$0xff] 0.0
      %57 = vst [vmem:[#allocation7 + $0x8] sm:$0xff] 0.0
      %58 = vst [vmem:[#allocation7 + $0x10] sm:$0xff] 0.0
      %59 = vst [vmem:[#allocation7 + $0x18] sm:$0xff] 0.0
    $region21: #{tpu_custom_call.1} parent=1 // pred_fallthru
      _
    %v60 = vld [vmem:[#allocation2] sm:$0xff]
    %v61 = vld [vmem:[#allocation2 + $0x8] sm:$0xff]
    %v62 = vld [vmem:[#allocation5] sm:$0xff]
    %v63 = vld [vmem:[#allocation5 + $0x8] sm:$0xff]
    %vm64 = vcmp.ge.f32.partialorder %v60, 0.0
    %vm65 = vcmp.ge.f32.partialorder %v61, 0.0
    %v66 = vsel %vm64, 1, 0
    %v67 = vsel %vm65, 1, 0
    %v68 = vcvt.s32.f32 %v66
    %v69 = vcvt.s32.f32 %v67
    %v70 = vsub.f32 %v62, %v68
    %v71 = vsub.f32 %v63, %v69
    %v72 = vmul.f32 %v60, %v70
    %v73 = vmul.f32 %v61, %v71
    %v74 = vmul.f32 %v60, 2.0
    %v75 = vmul.f32 %v61, 2.0
    %v76 = vmul.f32 %v74, %v68
    %v77 = vmul.f32 %v75, %v69
    %v78 = vsub.f32 %v60, %v76
    %v79 = vsub.f32 %v61, %v77
    %v80 = vmul.f32 %v78, 1.442695
    %v81 = vpow.pop %v80
    %v82 = vmul.f32 %v79, 1.442695
    %v83 = vpow.pop %v82
    %v84 = vadd.f32 %v81, 1.0
    %v85 = vadd.f32 %v83, 1.0
    %v86 = vlog2.pop %v84
    %v87 = vmul.f32 %v86, 0.6931472
    %v88 = vlog2.pop %v85
    %v89 = vmul.f32 %v88, 0.6931472
    %v90 = vsub.f32 %v72, %v87
    %v91 = vsub.f32 %v73, %v89
    %v92 = vmul.f32 %v62, %v90
    %v93 = vmul.f32 %v63, %v91
    %v94 = vsub.f32 0.0, %v92
    %v95 = vsub.f32 0.0, %v93
    %v96 = vsub.f32 1.0, %v62
    %v97 = vsub.f32 1.0, %v63
    %v98 = vmul.f32 %v96, %v90
    %v99 = vmul.f32 %v97, %v91
    %v100 = vsub.f32 0.0, %v98
    %v101 = vsub.f32 0.0, %v99
    %v102 = vld [vmem:[#allocation7] sm:$0xff]
    %v103 = vadd.f32 %v62, %v63
    %v104 = vadd.f32 %v102, %v103
    %105 = vst [vmem:[#allocation7] sm:$0xff] %v104
    %s106 = scalar_lea.vmem [#allocation7], 8
    %v107 = vld [vmem:[%s106] sm:$0xff]
    %v108 = vadd.f32 %v94, %v95
    %v109 = vadd.f32 %v107, %v108
    %110 = vst [vmem:[%s106] sm:$0xff] %v109
    %s111 = scalar_lea.vmem [#allocation7], 16
    %v112 = vld [vmem:[%s111] sm:$0xff]
    %v113 = vadd.f32 %v100, %v101
    %v114 = vadd.f32 %v112, %v113
    %115 = vst [vmem:[%s111] sm:$0xff] %v114
    // Predicated region
    $region22: #{tpu_custom_call.1} parent=1 // pred_check
      _
    $region23: #{tpu_custom_call.1} parent=1 // pred_check_branch
      %117 = sbr.rel (0) target = $region25
    $region24: #{tpu_custom_call.1} parent=1 // pred_region
      %s119 = ssub.s32 512, 512
      %120 = vsyncadd [#allocation4], %s119
      %s121 = sshll.u32 [#allocation7], 4
      %s122 = int_to_ptr.vmem [resolvable:$true] %s121
      %127 = dma.vmem_to_hbm [thread:$0]  %s122, 512, %s2, [#allocation4], 128, 128, 8
    $region25: #{tpu_custom_call.1} parent=1 // pred_fallthru
      _
    // Predicated region
    $region26: #{tpu_custom_call.1} parent=1 // pred_check
      _
    $region27: #{tpu_custom_call.1} parent=1 // pred_check_branch
      %129 = sbr.rel (0) target = $region29
    $region28: #{tpu_custom_call.1} parent=1 // pred_region
      %130 = dma.done [#allocation4], 512
    $region29: #{tpu_custom_call.1} parent=1 // pred_fallthru
      _
    %131 = vsyncpa [#allocation3], 1
    %132 = vsyncpa [#allocation6], 1
    %133 = vsyncpa [#allocation4], 1

</llo_original>
